<compile_context>
chip_gen: v6e
topology: v6e:2x2x1
jax: 0.10.0
libtpu: 0.0.40
codegen_flags: <defaults>
</compile_context>

<pallas_src>
import functools

import jax
import jax.numpy as jnp
from jax import lax
from jax.experimental import pallas as pl
from jax.experimental.pallas import tpu as pltpu

_STEP = 512          # tile_n granularity (multiple of the 128-lane width)
_SMALL_N = 512       # below this, fold batches per step instead of tiling N


def _mlp_kernel(x_ref, w_ref, b_ref, o_ref):
    """x_ref: (Bt, C, TN) un-transposed block; w_ref: (C, D); b_ref: (1, D) f32;
    o_ref: (Bt, TN, D).

    Contracting dim 0 of both operands computes x_block.T @ W, i.e. the
    NCHW -> (N, C) transpose is fused into the MXU feed (no extra HBM pass).
    """
    w = w_ref[...]
    b = b_ref[...]
    for i in range(x_ref.shape[0]):          # Bt is a small static constant
        acc = lax.dot_general(
            x_ref[i],
            w,
            dimension_numbers=(((0,), (0,)), ((), ())),
            preferred_element_type=jnp.float32,
        )
        o_ref[i] = (acc + b).astype(o_ref.dtype)


def _plan_tiles(B, C, N, D, x_bytes, o_bytes, w_bytes, max_tile_n):
    """Pick (Bt, tile_n, vmem_limit_bytes) from shapes + chip VMEM capacity."""
    try:
        vmem_cap = pltpu.get_tpu_info().vmem_capacity_bytes
    except Exception:
        vmem_cap = 64 * 1024 * 1024  # conservative: v7x per-TC physical VMEM
    # ~45 MiB on v7x (64 MiB), ~90 MiB on v5e/v6e (128 MiB); the 0.7 factor and
    # the 1.5x slack in est() leave room for Mosaic internal scratch.
    budget = max(int(0.70 * vmem_cap), 16 * 1024 * 1024)

    fixed = C * D * w_bytes + D * 4  # single-buffered weight + f32 bias

    def est(bt, tn):
        # double-buffered activation + output tiles, resident params, 1.5x slack
        return int(1.5 * (2 * bt * C * tn * x_bytes
                          + 2 * bt * tn * D * o_bytes
                          + fixed))

    if N <= _SMALL_N:
        tile_n = N
        bt = 1
        for cand in (8, 4, 2):     # fold batches per step to amortize overhead
            if cand <= B and B % cand == 0 and est(cand, tile_n) <= budget:
                bt = cand
                break
    else:
        bt = 1
        t = min(max_tile_n, ((N + _STEP - 1) // _STEP) * _STEP)
        t = max((t // _STEP) * _STEP, _STEP)
        while t > _STEP and est(1, t) > budget:
            t -= _STEP
        tile_n = t
    return bt, tile_n, budget


@functools.partial(jax.jit, static_argnames=("max_tile_n", "out_dtype"))
def segformer_mlp(hidden_states, weight, bias, *, max_tile_n=2048, out_dtype=None):
    """hidden_states: (B, C, H, W); weight: (C, D) [in, out]; bias: (D,).

    Returns (B, H*W, D) == Linear(hidden_states.flatten(2).transpose(1, 2)).
    Set out_dtype=jnp.bfloat16 to halve the output HBM stream when the
    downstream decode head is bf16 (numerics-sensitive -> off by default).
    """
    B, C, H, W = hidden_states.shape
    D = weight.shape[1]
    N = H * W
    if out_dtype is None:
        out_dtype = hidden_states.dtype

    # Free view (contiguous reshape): no transpose, no pad, no extra HBM pass.
    x3 = hidden_states.reshape(B, C, N)
    # Bias is tiny: pre-cast to f32 once so the per-tile add is a pure VPU add.
    bias2d = bias.reshape(1, D).astype(jnp.float32)

    x_bytes = jnp.dtype(hidden_states.dtype).itemsize
    w_bytes = jnp.dtype(weight.dtype).itemsize
    o_bytes = jnp.dtype(out_dtype).itemsize
    bt, tile_n, vmem_limit = _plan_tiles(
        B, C, N, D, x_bytes, o_bytes, w_bytes, max_tile_n)

    n_tiles = pl.cdiv(N, tile_n)
    b_tiles = pl.cdiv(B, bt)

    grid_spec = pltpu.PrefetchScalarGridSpec(
        num_scalar_prefetch=0,
        # Spatial tiles lead: the megacore-splittable axis is the big one, so
        # both v7x TensorCores get work even for B == 1 inference.
        grid=(n_tiles, b_tiles),
        in_specs=[
            # (Bt, C, tile_n) column-block of the untransposed (B, C, N) slab.
            pl.BlockSpec((bt, C, tile_n), lambda i, j: (j, 0, i)),
            # Weight / bias are grid-invariant: fetch once, single-buffered.
            pl.BlockSpec((C, D), lambda i, j: (0, 0),
                         pipeline_mode=pl.Buffered(1)),
            pl.BlockSpec((1, D), lambda i, j: (0, 0),
                         pipeline_mode=pl.Buffered(1)),
        ],
        out_specs=pl.BlockSpec((bt, tile_n, D), lambda i, j: (j, i, 0)),
    )

    return pl.pallas_call(
        _mlp_kernel,
        out_shape=jax.ShapeDtypeStruct((B, N, D), out_dtype),
        grid_spec=grid_spec,
        compiler_params=pltpu.CompilerParams(
            dimension_semantics=("parallel", "parallel"),
            vmem_limit_bytes=int(vmem_limit),
        ),
    )(x3, weight, bias2d)


def _reference(hidden_states, weight, bias):
    B, C, H, W = hidden_states.shape
    x = hidden_states.reshape(B, C, H * W).transpose(0, 2, 1)
    return x @ weight + bias


if __name__ == "__main__":
    key = jax.random.PRNGKey(0)

    # Case 1: small-N path (N=256 <= 512; batches folded per grid step).
    B, C, H, W, D = 2, 4, 16, 16, 32
    k_x, k_w, k_b, key = jax.random.split(key, 4)
    x = jax.random.normal(k_x, (B, C, H, W), dtype=jnp.float32)
    w = jax.random.normal(k_w, (C, D), dtype=jnp.float32) * 0.1
    b = jax.random.normal(k_b, (D,), dtype=jnp.float32) * 0.1
    out = jax.block_until_ready(segformer_mlp(x, w, b))
    ref = _reference(x, w, b)
    assert out.shape == (B, H * W, D), out.shape
    assert jnp.allclose(out, ref, atol=1e-5, rtol=1e-5), float(
        jnp.max(jnp.abs(out - ref)))

    # Case 2: large-N path (N=1024 > 512; row-tiled grid, B=1 megacore case).
    B2, C2, H2, W2, D2 = 1, 8, 32, 32, 64
    k_x2, k_w2, k_b2, key = jax.random.split(key, 4)
    x2 = jax.random.normal(k_x2, (B2, C2, H2, W2), dtype=jnp.float32)
    w2 = jax.random.normal(k_w2, (C2, D2), dtype=jnp.float32) * 0.1
    b2 = jax.random.normal(k_b2, (D2,), dtype=jnp.float32) * 0.1
    out2 = jax.block_until_ready(segformer_mlp(x2, w2, b2))
    ref2 = _reference(x2, w2, b2)
    assert out2.shape == (B2, H2 * W2, D2), out2.shape
    assert jnp.allclose(out2, ref2, atol=1e-5, rtol=1e-5), float(
        jnp.max(jnp.abs(out2 - ref2)))

    print("KERNEL_OK")
</pallas_src>

<mosaic_0001>
module attributes {stable_mosaic.version = 11 : i64} {
  func.func @_mlp_kernel(%arg0: i32, %arg1: i32, %arg2: memref<2x4x256xf32, #tpu.memory_space<vmem>>, %arg3: memref<4x32xf32, #tpu.memory_space<vmem>>, %arg4: memref<1x32xf32, #tpu.memory_space<vmem>>, %arg5: memref<2x256x32xf32, #tpu.memory_space<vmem>>) attributes {dimension_semantics = [#tpu.dimension_semantics<parallel>, #tpu.dimension_semantics<parallel>], iteration_bounds = array<i64: 1, 1>, scalar_prefetch = 0 : i64, scratch_operands = 0 : i64, tpu.core_type = #tpu.core_type<tc>, window_params = [{transform_indices = @transform_0, window_bounds = array<i64: 2, 4, 256>}, {pipeline_mode = #tpu.pipeline_mode<synchronous>, transform_indices = @transform_1, window_bounds = array<i64: 4, 32>}, {pipeline_mode = #tpu.pipeline_mode<synchronous>, transform_indices = @transform_2, window_bounds = array<i64: 1, 32>}, {transform_indices = @transform_3, window_bounds = array<i64: 2, 256, 32>}]} {
    %c0 = arith.constant 0 : index
    %c0_0 = arith.constant 0 : index
    %0 = vector.load %arg3[%c0, %c0_0] : memref<4x32xf32, #tpu.memory_space<vmem>>, vector<4x32xf32>
    %c0_1 = arith.constant 0 : index
    %c0_2 = arith.constant 0 : index
    %1 = vector.load %arg4[%c0_1, %c0_2] : memref<1x32xf32, #tpu.memory_space<vmem>>, vector<1x32xf32>
    %c0_3 = arith.constant 0 : index
    %c0_4 = arith.constant 0 : index
    %c0_5 = arith.constant 0 : index
    %2 = vector.load %arg2[%c0_3, %c0_4, %c0_5] : memref<2x4x256xf32, #tpu.memory_space<vmem>>, vector<1x4x256xf32>
    %3 = vector.shape_cast %2 : vector<1x4x256xf32> to vector<4x256xf32>
    %cst = arith.constant dense<0.000000e+00> : vector<256x32xf32>
    %4 = tpu.matmul %3, %0, %cst {dimension_numbers = #tpu.dot_dimension_numbers<[0], [0], [1], [1], [0, 1, 1, 1], [], []>} : vector<4x256xf32>, vector<4x32xf32>, vector<256x32xf32> -> vector<256x32xf32>
    %5 = vector.broadcast %1 : vector<1x32xf32> to vector<256x32xf32>
    %6 = arith.addf %4, %5 : vector<256x32xf32>
    %c0_6 = arith.constant 0 : index
    %c0_7 = arith.constant 0 : index
    %c0_8 = arith.constant 0 : index
    %7 = vector.load %arg5[%c0_6, %c0_7, %c0_8] : memref<2x256x32xf32, #tpu.memory_space<vmem>>, vector<1x256x32xf32>
    %8 = vector.shape_cast %7 : vector<1x256x32xf32> to vector<256x32xf32>
    %9 = vector.shape_cast %6 : vector<256x32xf32> to vector<1x256x32xf32>
    tpu.vector_store %arg5[%c0_6, %c0_7, %c0_8], %9 {strides = array<i32>} : memref<2x256x32xf32, #tpu.memory_space<vmem>>, vector<1x256x32xf32>,
    %c1 = arith.constant 1 : index
    %c0_9 = arith.constant 0 : index
    %c0_10 = arith.constant 0 : index
    %10 = vector.load %arg2[%c1, %c0_9, %c0_10] : memref<2x4x256xf32, #tpu.memory_space<vmem>>, vector<1x4x256xf32>
    %11 = vector.shape_cast %10 : vector<1x4x256xf32> to vector<4x256xf32>
    %cst_11 = arith.constant dense<0.000000e+00> : vector<256x32xf32>
    %12 = tpu.matmul %11, %0, %cst_11 {dimension_numbers = #tpu.dot_dimension_numbers<[0], [0], [1], [1], [0, 1, 1, 1], [], []>} : vector<4x256xf32>, vector<4x32xf32>, vector<256x32xf32> -> vector<256x32xf32>
    %13 = vector.broadcast %1 : vector<1x32xf32> to vector<256x32xf32>
    %14 = arith.addf %12, %13 : vector<256x32xf32>
    %c1_12 = arith.constant 1 : index
    %c0_13 = arith.constant 0 : index
    %c0_14 = arith.constant 0 : index
    %15 = vector.load %arg5[%c1_12, %c0_13, %c0_14] : memref<2x256x32xf32, #tpu.memory_space<vmem>>, vector<1x256x32xf32>
    %16 = vector.shape_cast %15 : vector<1x256x32xf32> to vector<256x32xf32>
    %17 = vector.shape_cast %14 : vector<256x32xf32> to vector<1x256x32xf32>
    tpu.vector_store %arg5[%c1_12, %c0_13, %c0_14], %17 {strides = array<i32>} : memref<2x256x32xf32, #tpu.memory_space<vmem>>, vector<1x256x32xf32>,
    return
  }
  func.func @transform_0(%arg0: i32, %arg1: i32) -> (i32, i32, i32) {
    %c0_i32 = arith.constant 0 : i32
    %c0_i32_0 = arith.constant 0 : i32
    return %arg1, %c0_i32, %arg0 : i32, i32, i32
  }
  func.func @transform_1(%arg0: i32, %arg1: i32) -> (i32, i32) {
    %c0_i32 = arith.constant 0 : i32
    %c0_i32_0 = arith.constant 0 : i32
    %c0_i32_1 = arith.constant 0 : i32
    return %c0_i32, %c0_i32_0 : i32, i32
  }
  func.func @transform_2(%arg0: i32, %arg1: i32) -> (i32, i32) {
    %c0_i32 = arith.constant 0 : i32
    %c0_i32_0 = arith.constant 0 : i32
    %c0_i32_1 = arith.constant 0 : i32
    return %c0_i32, %c0_i32_0 : i32, i32
  }
  func.func @transform_3(%arg0: i32, %arg1: i32) -> (i32, i32, i32) {
    %c0_i32 = arith.constant 0 : i32
    %c0_i32_0 = arith.constant 0 : i32
    return %arg1, %arg0, %c0_i32 : i32, i32, i32
  }
}

</mosaic_0001>

<llo_original>
// kernel: segformer_mlp.1
$region0: #{segformer_mlp.1}
  #allocation0 [shape = 'u32[]', space=smem, size = 0x4, offset = 0x4, fixed_abs, tag = 'smem constant byte address 0x4 - core index']
  #allocation1 [shape = 'u32[144,128]{1,0:T(1,128)}', space=vmem, size = 0x12000, scoped, tag = 'internal scratch']
  %s0 = inlined_call_operand.vmem [shape: f32[2,4,256], index: 0, kind: input, shape index: {}]
  %s1 = inlined_call_operand.vmem [shape: f32[4,32], index: 1, kind: input, shape index: {}]
  %s2 = inlined_call_operand.vmem [shape: f32[1,32], index: 2, kind: input, shape index: {}]
  %s3 = inlined_call_operand.vmem [shape: f32[2,256,32], index: 3, kind: output, shape index: {}]
  %s4 = sld [smem:[#allocation0]]
  $region22: #{segformer_mlp.1} parent=0
    _
  %s6 = ssub.s32 1, %s4
  %s7 = scalar_select 0, %s6, %s4
  // Predicated region
  $region2: #{segformer_mlp.1} parent=0 // pred_check
    _
  $region3: #{segformer_mlp.1} parent=0 // pred_check_branch
    %9 = sbr.rel (0) target = $region5
  $region4: #{segformer_mlp.1} parent=0 // pred_region
    _
  $region5: #{segformer_mlp.1} parent=0 // pred_fallthru
    _
  // Predicated region
  $region6: #{segformer_mlp.1} parent=0 // pred_check
    _
  $region7: #{segformer_mlp.1} parent=0 // pred_check_branch
    %11 = sbr.rel (0) target = $region9
  $region8: #{segformer_mlp.1} parent=0 // pred_region
    _
  $region9: #{segformer_mlp.1} parent=0 // pred_fallthru
    _
  // Predicated region
  $region10: #{segformer_mlp.1} parent=0 // pred_check
    _
  $region11: #{segformer_mlp.1} parent=0 // pred_check_branch
    %13 = sbr.rel (0) target = $region13
  $region12: #{segformer_mlp.1} parent=0 // pred_region
    _
  $region13: #{segformer_mlp.1} parent=0 // pred_fallthru
    _
  %v14 = vld [vmem:[%s1] sm:$0xf]
  %v15 = vld [vmem:[%s2] sm:$0x1]
  %v16 = vld [vmem:[%s0] sm:$0xff]
  %v18 = vlaneseq
  %v19 = vshrl.u32 %v18, 7
  %v20 = vsub.s32 0, %v19
  %v21 = vrot.slane %v15, %v20
  %v24 = vcombine.high %v16, %v16
  %26 = vxpose.xlu0.b32.start [1/16] %v16, 128
  %27 = vxpose.xlu0.b32.cont [2/16] 0.0, 128
  %28 = vxpose.xlu0.b32.cont [3/16] 0.0, 128
  %29 = vxpose.xlu0.b32.cont [4/16] 0.0, 128
  %30 = vxpose.xlu0.b32.cont [5/16] 0.0, 128
  %31 = vxpose.xlu0.b32.cont [6/16] 0.0, 128
  %32 = vxpose.xlu0.b32.cont [7/16] 0.0, 128
  %33 = vxpose.xlu0.b32.cont [8/16] 0.0, 128
  %34 = vxpose.xlu0.b32.cont [9/16] 0.0, 128
  %35 = vxpose.xlu0.b32.cont [10/16] 0.0, 128
  %36 = vxpose.xlu0.b32.cont [11/16] 0.0, 128
  %37 = vxpose.xlu0.b32.cont [12/16] 0.0, 128
  %38 = vxpose.xlu0.b32.cont [13/16] 0.0, 128
  %39 = vxpose.xlu0.b32.cont [14/16] 0.0, 128
  %40 = vxpose.xlu0.b32.cont [15/16] 0.0, 128
  %41 = vxpose.xlu0.b32.end [16/16] 0.0, 128
  %v42 = vpop.trf.xlu0
  %v43 = vpop.trf.xlu0
  %v44 = vpop.trf.xlu0
  %v45 = vpop.trf.xlu0
  %v46 = vpop.trf.xlu0
  %v47 = vpop.trf.xlu0
  %v48 = vpop.trf.xlu0
  %v49 = vpop.trf.xlu0
  %v50 = vpop.trf.xlu0
  %v51 = vpop.trf.xlu0
  %v52 = vpop.trf.xlu0
  %v53 = vpop.trf.xlu0
  %v54 = vpop.trf.xlu0
  %v55 = vpop.trf.xlu0
  %v56 = vpop.trf.xlu0
  %v57 = vpop.trf.xlu0
  %58 = vxpose.xlu0.b32.start [1/16] %v24, 128
  %59 = vxpose.xlu0.b32.cont [2/16] 0.0, 128
  %60 = vxpose.xlu0.b32.cont [3/16] 0.0, 128
  %61 = vxpose.xlu0.b32.cont [4/16] 0.0, 128
  %62 = vxpose.xlu0.b32.cont [5/16] 0.0, 128
  %63 = vxpose.xlu0.b32.cont [6/16] 0.0, 128
  %64 = vxpose.xlu0.b32.cont [7/16] 0.0, 128
  %65 = vxpose.xlu0.b32.cont [8/16] 0.0, 128
  %66 = vxpose.xlu0.b32.cont [9/16] 0.0, 128
  %67 = vxpose.xlu0.b32.cont [10/16] 0.0, 128
  %68 = vxpose.xlu0.b32.cont [11/16] 0.0, 128
  %69 = vxpose.xlu0.b32.cont [12/16] 0.0, 128
  %70 = vxpose.xlu0.b32.cont [13/16] 0.0, 128
  %71 = vxpose.xlu0.b32.cont [14/16] 0.0, 128
  %72 = vxpose.xlu0.b32.cont [15/16] 0.0, 128
  %73 = vxpose.xlu0.b32.end [16/16] 0.0, 128
  %v74 = vpop.trf.xlu0
  %v75 = vpop.trf.xlu0
  %v76 = vpop.trf.xlu0
  %v77 = vpop.trf.xlu0
  %v78 = vpop.trf.xlu0
  %v79 = vpop.trf.xlu0
  %v80 = vpop.trf.xlu0
  %v81 = vpop.trf.xlu0
  %v82 = vpop.trf.xlu0
  %v83 = vpop.trf.xlu0
  %v84 = vpop.trf.xlu0
  %v85 = vpop.trf.xlu0
  %v86 = vpop.trf.xlu0
  %v87 = vpop.trf.xlu0
  %v88 = vpop.trf.xlu0
  %v89 = vpop.trf.xlu0
  %vm90 = vcmask 31744
  %v92 = vsel %vm90, %v42, 0
  %v95 = vsel %vm90, %v43, 0
  %v98 = vsel %vm90, %v44, 0
  %v101 = vsel %vm90, %v45, 0
  %v104 = vsel %vm90, %v46, 0
  %v107 = vsel %vm90, %v47, 0
  %v110 = vsel %vm90, %v48, 0
  %v113 = vsel %vm90, %v49, 0
  %v116 = vsel %vm90, %v50, 0
  %v119 = vsel %vm90, %v51, 0
  %v122 = vsel %vm90, %v52, 0
  %v125 = vsel %vm90, %v53, 0
  %v128 = vsel %vm90, %v54, 0
  %v131 = vsel %vm90, %v55, 0
  %v134 = vsel %vm90, %v56, 0
  %v137 = vsel %vm90, %v57, 0
  %v140 = vsel %vm90, %v74, 0
  %v143 = vsel %vm90, %v75, 0
  %v146 = vsel %vm90, %v76, 0
  %v149 = vsel %vm90, %v77, 0
  %v152 = vsel %vm90, %v78, 0
  %v155 = vsel %vm90, %v79, 0
  %v158 = vsel %vm90, %v80, 0
  %v161 = vsel %vm90, %v81, 0
  %v164 = vsel %vm90, %v82, 0
  %v167 = vsel %vm90, %v83, 0
  %v170 = vsel %vm90, %v84, 0
  %v173 = vsel %vm90, %v85, 0
  %v176 = vsel %vm90, %v86, 0
  %v179 = vsel %vm90, %v87, 0
  %v182 = vsel %vm90, %v88, 0
  %v185 = vsel %vm90, %v89, 0
  %vm187 = vcmask 1043456
  %v189 = vsel %vm187, %v14, 0
  %191 = vmatprep.subr.mxu0 0.0
  %192 = vmatpush1.msra.mxu0 0.0
  %193 = vmatprep.subr.mxu0 0.0
  %194 = vmatpush1.msra.mxu0 0.0
  %195 = vmatprep.subr.mxu0 0.0
  %196 = vmatpush1.msra.mxu0 0.0
  %197 = vmatprep.subr.mxu0 0.0
  %198 = vmatpush1.msra.mxu0 0.0
  %199 = vmatprep.subr.mxu0 0.0
  %200 = vmatpush1.msra.mxu0 0.0
  %201 = vmatprep.subr.mxu0 0.0
  %202 = vmatpush1.msra.mxu0 0.0
  %203 = vmatprep.subr.mxu0 0.0
  %204 = vmatpush1.msra.mxu0 0.0
  %205 = vmatprep.subr.mxu0 0.0
  %206 = vmatpush1.msra.mxu0 0.0
  %207 = vmatprep.subr.mxu0 0.0
  %208 = vmatpush1.msra.mxu0 0.0
  %209 = vmatprep.subr.mxu0 0.0
  %210 = vmatpush1.msra.mxu0 0.0
  %211 = vmatprep.subr.mxu0 0.0
  %212 = vmatpush1.msra.mxu0 0.0
  %213 = vmatprep.subr.mxu0 0.0
  %214 = vmatpush1.msra.mxu0 0.0
  %215 = vmatprep.subr.mxu0 0.0
  %216 = vmatpush1.msra.mxu0 0.0
  %217 = vmatprep.subr.mxu0 0.0
  %218 = vmatpush1.msra.mxu0 0.0
  %219 = vmatprep.subr.mxu0 0.0
  %220 = vmatpush1.msra.mxu0 0.0
  %221 = vmatprep.subr.mxu0 0.0
  %222 = vmatpush1.msra.mxu0 %v189
  %223 = vmatprep.subr.mxu0 0.0
  %224 = vmatpush2.msra.mxu0 0.0
  %225 = vmatprep.subr.mxu0 0.0
  %226 = vmatpush2.msra.mxu0 0.0
  %227 = vmatprep.subr.mxu0 0.0
  %228 = vmatpush2.msra.mxu0 0.0
  %229 = vmatprep.subr.mxu0 0.0
  %230 = vmatpush2.msra.mxu0 0.0
  %231 = vmatprep.subr.mxu0 0.0
  %232 = vmatpush2.msra.mxu0 0.0
  %233 = vmatprep.subr.mxu0 0.0
  %234 = vmatpush2.msra.mxu0 0.0
  %235 = vmatprep.subr.mxu0 0.0
  %236 = vmatpush2.msra.mxu0 0.0
  %237 = vmatprep.subr.mxu0 0.0
  %238 = vmatpush2.msra.mxu0 0.0
  %239 = vmatprep.subr.mxu0 0.0
  %240 = vmatpush2.msra.mxu0 0.0
  %241 = vmatprep.subr.mxu0 0.0
  %242 = vmatpush2.msra.mxu0 0.0
  %243 = vmatprep.subr.mxu0 0.0
  %244 = vmatpush2.msra.mxu0 0.0
  %245 = vmatprep.subr.mxu0 0.0
  %246 = vmatpush2.msra.mxu0 0.0
  %247 = vmatprep.subr.mxu0 0.0
  %248 = vmatpush2.msra.mxu0 0.0
  %249 = vmatprep.subr.mxu0 0.0
  %250 = vmatpush2.msra.mxu0 0.0
  %251 = vmatprep.subr.mxu0 0.0
  %252 = vmatpush2.msra.mxu0 0.0
  %253 = vmatprep.subr.mxu0 0.0
  %254 = vmatpush2.msra.mxu0 0.0
  %255 = vmatprep.mubr.f32.mxu0 0.0
  %256 = vmatmul.mubr.f32.gmra.mxu0 %v92
  %v257 = vpop.f32.mrf.mxu0
  %v258 = vadd.f32 %v21, %v257
  %v259 = vpop.f32.mrf.mxu0
  %260 = vmatprep.mubr.f32.mxu0 0.0
  %261 = vmatmul.mubr.f32.gmra.mxu0 %v95
  %v262 = vpop.f32.mrf.mxu0
  %v263 = vadd.f32 %v21, %v262
  %v264 = vpop.f32.mrf.mxu0
  %265 = vmatprep.mubr.f32.mxu0 0.0
  %266 = vmatmul.mubr.f32.gmra.mxu0 %v98
  %v267 = vpop.f32.mrf.mxu0
  %v268 = vadd.f32 %v21, %v267
  %v269 = vpop.f32.mrf.mxu0
  %270 = vmatprep.mubr.f32.mxu0 0.0
  %271 = vmatmul.mubr.f32.gmra.mxu0 %v101
  %v272 = vpop.f32.mrf.mxu0
  %v273 = vadd.f32 %v21, %v272
  %v274 = vpop.f32.mrf.mxu0
  %275 = vmatprep.mubr.f32.mxu0 0.0
  %276 = vmatmul.mubr.f32.gmra.mxu0 %v104
  %v277 = vpop.f32.mrf.mxu0
  %v278 = vadd.f32 %v21, %v277
  %v279 = vpop.f32.mrf.mxu0
  %280 = vmatprep.mubr.f32.mxu0 0.0
  %281 = vmatmul.mubr.f32.gmra.mxu0 %v107
  %v282 = vpop.f32.mrf.mxu0
  %v283 = vadd.f32 %v21, %v282
  %v284 = vpop.f32.mrf.mxu0
  %285 = vmatprep.mubr.f32.mxu0 0.0
  %286 = vmatmul.mubr.f32.gmra.mxu0 %v110
  %v287 = vpop.f32.mrf.mxu0
  %v288 = vadd.f32 %v21, %v287
  %v289 = vpop.f32.mrf.mxu0
  %290 = vmatprep.mubr.f32.mxu0 0.0
  %291 = vmatmul.mubr.f32.gmra.mxu0 %v113
  %v292 = vpop.f32.mrf.mxu0
  %v293 = vadd.f32 %v21, %v292
  %v294 = vpop.f32.mrf.mxu0
  %295 = vmatprep.mubr.f32.mxu0 0.0
  %296 = vmatmul.mubr.f32.gmra.mxu0 %v116
  %v297 = vpop.f32.mrf.mxu0
  %v298 = vadd.f32 %v21, %v297
  %v299 = vpop.f32.mrf.mxu0
  %300 = vmatprep.mubr.f32.mxu0 0.0
  %301 = vmatmul.mubr.f32.gmra.mxu0 %v119
  %v302 = vpop.f32.mrf.mxu0
  %v303 = vadd.f32 %v21, %v302
  %v304 = vpop.f32.mrf.mxu0
  %305 = vmatprep.mubr.f32.mxu0 0.0
  %306 = vmatmul.mubr.f32.gmra.mxu0 %v122
  %v307 = vpop.f32.mrf.mxu0
  %v308 = vadd.f32 %v21, %v307
  %v309 = vpop.f32.mrf.mxu0
  %310 = vmatprep.mubr.f32.mxu0 0.0
  %311 = vmatmul.mubr.f32.gmra.mxu0 %v125
  %v312 = vpop.f32.mrf.mxu0
  %v313 = vadd.f32 %v21, %v312
  %v314 = vpop.f32.mrf.mxu0
  %315 = vmatprep.mubr.f32.mxu0 0.0
  %316 = vmatmul.mubr.f32.gmra.mxu0 %v128
  %v317 = vpop.f32.mrf.mxu0
  %v318 = vadd.f32 %v21, %v317
  %v319 = vpop.f32.mrf.mxu0
  %320 = vmatprep.mubr.f32.mxu0 0.0
  %321 = vmatmul.mubr.f32.gmra.mxu0 %v131
  %v322 = vpop.f32.mrf.mxu0
  %v323 = vadd.f32 %v21, %v322
  %v324 = vpop.f32.mrf.mxu0
  %325 = vmatprep.mubr.f32.mxu0 0.0
  %326 = vmatmul.mubr.f32.gmra.mxu0 %v134
  %v327 = vpop.f32.mrf.mxu0
  %v328 = vadd.f32 %v21, %v327
  %v329 = vpop.f32.mrf.mxu0
  %330 = vmatprep.mubr.f32.mxu0 0.0
  %331 = vmatmul.mubr.f32.gmra.mxu0 %v137
  %v332 = vpop.f32.mrf.mxu0
  %v333 = vadd.f32 %v21, %v332
  %v334 = vpop.f32.mrf.mxu0
  %335 = vmatprep.mubr.f32.mxu0 0.0
  %336 = vmatmul.mubr.f32.gmra.mxu0 %v140
  %v337 = vpop.f32.mrf.mxu0
  %v338 = vadd.f32 %v21, %v337
  %v339 = vpop.f32.mrf.mxu0
  %340 = vmatprep.mubr.f32.mxu0 0.0
  %341 = vmatmul.mubr.f32.gmra.mxu0 %v143
  %v342 = vpop.f32.mrf.mxu0
  %v343 = vadd.f32 %v21, %v342
  %v344 = vpop.f32.mrf.mxu0
  %345 = vmatprep.mubr.f32.mxu0 0.0
  %346 = vmatmul.mubr.f32.gmra.mxu0 %v146
  %v347 = vpop.f32.mrf.mxu0
  %v348 = vadd.f32 %v21, %v347
  %v349 = vpop.f32.mrf.mxu0
  %350 = vmatprep.mubr.f32.mxu0 0.0
  %351 = vmatmul.mubr.f32.gmra.mxu0 %v149
  %v352 = vpop.f32.mrf.mxu0
  %v353 = vadd.f32 %v21, %v352
  %v354 = vpop.f32.mrf.mxu0
  %355 = vmatprep.mubr.f32.mxu0 0.0
  %356 = vmatmul.mubr.f32.gmra.mxu0 %v152
  %v357 = vpop.f32.mrf.mxu0
  %v358 = vadd.f32 %v21, %v357
  %v359 = vpop.f32.mrf.mxu0
  %360 = vmatprep.mubr.f32.mxu0 0.0
  %361 = vmatmul.mubr.f32.gmra.mxu0 %v155
  %v362 = vpop.f32.mrf.mxu0
  %v363 = vadd.f32 %v21, %v362
  %v364 = vpop.f32.mrf.mxu0
  %365 = vmatprep.mubr.f32.mxu0 0.0
  %366 = vmatmul.mubr.f32.gmra.mxu0 %v158
  %v367 = vpop.f32.mrf.mxu0
  %v368 = vadd.f32 %v21, %v367
  %v369 = vpop.f32.mrf.mxu0
  %370 = vmatprep.mubr.f32.mxu0 0.0
  %371 = vmatmul.mubr.f32.gmra.mxu0 %v161
  %v372 = vpop.f32.mrf.mxu0
  %v373 = vadd.f32 %v21, %v372
  %v374 = vpop.f32.mrf.mxu0
  %375 = vmatprep.mubr.f32.mxu0 0.0
  %376 = vmatmul.mubr.f32.gmra.mxu0 %v164
  %v377 = vpop.f32.mrf.mxu0
  %v378 = vadd.f32 %v21, %v377
  %v379 = vpop.f32.mrf.mxu0
  %380 = vmatprep.mubr.f32.mxu0 0.0
  %381 = vmatmul.mubr.f32.gmra.mxu0 %v167
  %v382 = vpop.f32.mrf.mxu0
  %v383 = vadd.f32 %v21, %v382
  %v384 = vpop.f32.mrf.mxu0
  %385 = vmatprep.mubr.f32.mxu0 0.0
  %386 = vmatmul.mubr.f32.gmra.mxu0 %v170
  %v387 = vpop.f32.mrf.mxu0
  %v388 = vadd.f32 %v21, %v387
  %v389 = vpop.f32.mrf.mxu0
  %390 = vmatprep.mubr.f32.mxu0 0.0
  %391 = vmatmul.mubr.f32.gmra.mxu0 %v173
  %v392 = vpop.f32.mrf.mxu0
  %v393 = vadd.f32 %v21, %v392
  %v394 = vpop.f32.mrf.mxu0
  %395 = vmatprep.mubr.f32.mxu0 0.0
  %396 = vmatmul.mubr.f32.gmra.mxu0 %v176
  %v397 = vpop.f32.mrf.mxu0
  %v398 = vadd.f32 %v21, %v397
  %v399 = vpop.f32.mrf.mxu0
  %400 = vmatprep.mubr.f32.mxu0 0.0
  %401 = vmatmul.mubr.f32.gmra.mxu0 %v179
  %v402 = vpop.f32.mrf.mxu0
  %v403 = vadd.f32 %v21, %v402
  %v404 = vpop.f32.mrf.mxu0
  %405 = vmatprep.mubr.f32.mxu0 0.0
  %406 = vmatmul.mubr.f32.gmra.mxu0 %v182
  %v407 = vpop.f32.mrf.mxu0
  %v408 = vadd.f32 %v21, %v407
  %v409 = vpop.f32.mrf.mxu0
  %410 = vmatprep.mubr.f32.mxu0 0.0
  %411 = vmatmul.mubr.f32.gmra.mxu0 %v185
  %v412 = vpop.f32.mrf.mxu0
  %v413 = vadd.f32 %v21, %v412
  %v414 = vpop.f32.mrf.mxu0
  %415 = vdwg.mxu0
  %vm416 = vcmask 261120
  %417 = vst.msk [vmem:[%s3] sm:$0xff] %vm416, %v258
  %418 = vst.msk [vmem:[%s3 + $0x8] sm:$0xff] %vm416, %v263
  %419 = vst.msk [vmem:[%s3 + $0x10] sm:$0xff] %vm416, %v268
  %420 = vst.msk [vmem:[%s3 + $0x18] sm:$0xff] %vm416, %v273
  %421 = vst.msk [vmem:[%s3 + $0x20] sm:$0xff] %vm416, %v278
  %422 = vst.msk [vmem:[%s3 + $0x28] sm:$0xff] %vm416, %v283
  %423 = vst.msk [vmem:[%s3 + $0x30] sm:$0xff] %vm416, %v288
  %424 = vst.msk [vmem:[%s3 + $0x38] sm:$0xff] %vm416, %v293
  %425 = vst.msk [vmem:[%s3 + $0x40] sm:$0xff] %vm416, %v298
  %426 = vst.msk [vmem:[%s3 + $0x48] sm:$0xff] %vm416, %v303
  %427 = vst.msk [vmem:[%s3 + $0x50] sm:$0xff] %vm416, %v308
  %428 = vst.msk [vmem:[%s3 + $0x58] sm:$0xff] %vm416, %v313
  %429 = vst.msk [vmem:[%s3 + $0x60] sm:$0xff] %vm416, %v318
  %430 = vst.msk [vmem:[%s3 + $0x68] sm:$0xff] %vm416, %v323
  %431 = vst.msk [vmem:[%s3 + $0x70] sm:$0xff] %vm416, %v328
  %432 = vst.msk [vmem:[%s3 + $0x78] sm:$0xff] %vm416, %v333
  %433 = vst.msk [vmem:[%s3 + $0x80] sm:$0xff] %vm416, %v338
  %434 = vst.msk [vmem:[%s3 + $0x88] sm:$0xff] %vm416, %v343
  %435 = vst.msk [vmem:[%s3 + $0x90] sm:$0xff] %vm416, %v348
  %436 = vst.msk [vmem:[%s3 + $0x98] sm:$0xff] %vm416, %v353
  %437 = vst.msk [vmem:[%s3 + $0xa0] sm:$0xff] %vm416, %v358
  %438 = vst.msk [vmem:[%s3 + $0xa8] sm:$0xff] %vm416, %v363
  %439 = vst.msk [vmem:[%s3 + $0xb0] sm:$0xff] %vm416, %v368
  %440 = vst.msk [vmem:[%s3 + $0xb8] sm:$0xff] %vm416, %v373
  %441 = vst.msk [vmem:[%s3 + $0xc0] sm:$0xff] %vm416, %v378
  %442 = vst.msk [vmem:[%s3 + $0xc8] sm:$0xff] %vm416, %v383
  %443 = vst.msk [vmem:[%s3 + $0xd0] sm:$0xff] %vm416, %v388
  %444 = vst.msk [vmem:[%s3 + $0xd8] sm:$0xff] %vm416, %v393
  %445 = vst.msk [vmem:[%s3 + $0xe0] sm:$0xff] %vm416, %v398
  %446 = vst.msk [vmem:[%s3 + $0xe8] sm:$0xff] %vm416, %v403
  %447 = vst.msk [vmem:[%s3 + $0xf0] sm:$0xff] %vm416, %v408
  %448 = vst.msk [vmem:[%s3 + $0xf8] sm:$0xff] %vm416, %v413
  %s449 = scalar_lea.vmem %s0, 8
  %v450 = vld [vmem:[%s449] sm:$0xff]
  %v452 = vcombine.high %v450, %v450
  %454 = vxpose.xlu0.b32.start [1/16] %v450, 128
  %455 = vxpose.xlu0.b32.cont [2/16] 0.0, 128
  %456 = vxpose.xlu0.b32.cont [3/16] 0.0, 128
  %457 = vxpose.xlu0.b32.cont [4/16] 0.0, 128
  %458 = vxpose.xlu0.b32.cont [5/16] 0.0, 128
  %459 = vxpose.xlu0.b32.cont [6/16] 0.0, 128
  %460 = vxpose.xlu0.b32.cont [7/16] 0.0, 128
  %461 = vxpose.xlu0.b32.cont [8/16] 0.0, 128
  %462 = vxpose.xlu0.b32.cont [9/16] 0.0, 128
  %463 = vxpose.xlu0.b32.cont [10/16] 0.0, 128
  %464 = vxpose.xlu0.b32.cont [11/16] 0.0, 128
  %465 = vxpose.xlu0.b32.cont [12/16] 0.0, 128
  %466 = vxpose.xlu0.b32.cont [13/16] 0.0, 128
  %467 = vxpose.xlu0.b32.cont [14/16] 0.0, 128
  %468 = vxpose.xlu0.b32.cont [15/16] 0.0, 128
  %469 = vxpose.xlu0.b32.end [16/16] 0.0, 128
  %v470 = vpop.trf.xlu0
  %v471 = vpop.trf.xlu0
  %v472 = vpop.trf.xlu0
  %v473 = vpop.trf.xlu0
  %v474 = vpop.trf.xlu0
  %v475 = vpop.trf.xlu0
  %v476 = vpop.trf.xlu0
  %v477 = vpop.trf.xlu0
  %v478 = vpop.trf.xlu0
  %v479 = vpop.trf.xlu0
  %v480 = vpop.trf.xlu0
  %v481 = vpop.trf.xlu0
  %v482 = vpop.trf.xlu0
  %v483 = vpop.trf.xlu0
  %v484 = vpop.trf.xlu0
  %v485 = vpop.trf.xlu0
  %486 = vxpose.xlu0.b32.start [1/16] %v452, 128
  %487 = vxpose.xlu0.b32.cont [2/16] 0.0, 128
  %488 = vxpose.xlu0.b32.cont [3/16] 0.0, 128
  %489 = vxpose.xlu0.b32.cont [4/16] 0.0, 128
  %490 = vxpose.xlu0.b32.cont [5/16] 0.0, 128
  %491 = vxpose.xlu0.b32.cont [6/16] 0.0, 128
  %492 = vxpose.xlu0.b32.cont [7/16] 0.0, 128
  %493 = vxpose.xlu0.b32.cont [8/16] 0.0, 128
  %494 = vxpose.xlu0.b32.cont [9/16] 0.0, 128
  %495 = vxpose.xlu0.b32.cont [10/16] 0.0, 128
  %496 = vxpose.xlu0.b32.cont [11/16] 0.0, 128
  %497 = vxpose.xlu0.b32.cont [12/16] 0.0, 128
  %498 = vxpose.xlu0.b32.cont [13/16] 0.0, 128
  %499 = vxpose.xlu0.b32.cont [14/16] 0.0, 128
  %500 = vxpose.xlu0.b32.cont [15/16] 0.0, 128
  %501 = vxpose.xlu0.b32.end [16/16] 0.0, 128
  %v502 = vpop.trf.xlu0
  %v503 = vpop.trf.xlu0
  %v504 = vpop.trf.xlu0
  %v505 = vpop.trf.xlu0
  %v506 = vpop.trf.xlu0
  %v507 = vpop.trf.xlu0
  %v508 = vpop.trf.xlu0
  %v509 = vpop.trf.xlu0
  %v510 = vpop.trf.xlu0
  %v511 = vpop.trf.xlu0
  %v512 = vpop.trf.xlu0
  %v513 = vpop.trf.xlu0
  %v514 = vpop.trf.xlu0
  %v515 = vpop.trf.xlu0
  %v516 = vpop.trf.xlu0
  %v517 = vpop.trf.xlu0
  %v519 = vsel %vm90, %v470, 0
  %v522 = vsel %vm90, %v471, 0
  %v525 = vsel %vm90, %v472, 0
  %v528 = vsel %vm90, %v473, 0
  %v531 = vsel %vm90, %v474, 0
  %v534 = vsel %vm90, %v475, 0
  %v537 = vsel %vm90, %v476, 0
  %v540 = vsel %vm90, %v477, 0
  %v543 = vsel %vm90, %v478, 0
  %v546 = vsel %vm90, %v479, 0
  %v549 = vsel %vm90, %v480, 0
  %v552 = vsel %vm90, %v481, 0
  %v555 = vsel %vm90, %v482, 0
  %v558 = vsel %vm90, %v483, 0
  %v561 = vsel %vm90, %v484, 0
  %v564 = vsel %vm90, %v485, 0
  %v567 = vsel %vm90, %v502, 0
  %v570 = vsel %vm90, %v503, 0
  %v573 = vsel %vm90, %v504, 0
  %v576 = vsel %vm90, %v505, 0
  %v579 = vsel %vm90, %v506, 0
  %v582 = vsel %vm90, %v507, 0
  %v585 = vsel %vm90, %v508, 0
  %v588 = vsel %vm90, %v509, 0
  %v591 = vsel %vm90, %v510, 0
  %v594 = vsel %vm90, %v511, 0
  %v597 = vsel %vm90, %v512, 0
  %v600 = vsel %vm90, %v513, 0
  %v603 = vsel %vm90, %v514, 0
  %v606 = vsel %vm90, %v515, 0
  %v609 = vsel %vm90, %v516, 0
  %v612 = vsel %vm90, %v517, 0
  %614 = vmatprep.subr.mxu0 0.0
  %615 = vmatpush1.msra.mxu0 0.0
  %616 = vmatprep.subr.mxu0 0.0
  %617 = vmatpush1.msra.mxu0 0.0
  %618 = vmatprep.subr.mxu0 0.0
  %619 = vmatpush1.msra.mxu0 0.0
  %620 = vmatprep.subr.mxu0 0.0
  %621 = vmatpush1.msra.mxu0 0.0
  %622 = vmatprep.subr.mxu0 0.0
  %623 = vmatpush1.msra.mxu0 0.0
  %624 = vmatprep.subr.mxu0 0.0
  %625 = vmatpush1.msra.mxu0 0.0
  %626 = vmatprep.subr.mxu0 0.0
  %627 = vmatpush1.msra.mxu0 0.0
  %628 = vmatprep.subr.mxu0 0.0
  %629 = vmatpush1.msra.mxu0 0.0
  %630 = vmatprep.subr.mxu0 0.0
  %631 = vmatpush1.msra.mxu0 0.0
  %632 = vmatprep.subr.mxu0 0.0
  %633 = vmatpush1.msra.mxu0 0.0
  %634 = vmatprep.subr.mxu0 0.0
  %635 = vmatpush1.msra.mxu0 0.0
  %636 = vmatprep.subr.mxu0 0.0
  %637 = vmatpush1.msra.mxu0 0.0
  %638 = vmatprep.subr.mxu0 0.0
  %639 = vmatpush1.msra.mxu0 0.0
  %640 = vmatprep.subr.mxu0 0.0
  %641 = vmatpush1.msra.mxu0 0.0
  %642 = vmatprep.subr.mxu0 0.0
  %643 = vmatpush1.msra.mxu0 0.0
  %644 = vmatprep.subr.mxu0 0.0
  %645 = vmatpush1.msra.mxu0 %v189
  %646 = vmatprep.subr.mxu0 0.0
  %647 = vmatpush2.msra.mxu0 0.0
  %648 = vmatprep.subr.mxu0 0.0
  %649 = vmatpush2.msra.mxu0 0.0
  %650 = vmatprep.subr.mxu0 0.0
  %651 = vmatpush2.msra.mxu0 0.0
  %652 = vmatprep.subr.mxu0 0.0
  %653 = vmatpush2.msra.mxu0 0.0
  %654 = vmatprep.subr.mxu0 0.0
  %655 = vmatpush2.msra.mxu0 0.0
  %656 = vmatprep.subr.mxu0 0.0
  %657 = vmatpush2.msra.mxu0 0.0
  %658 = vmatprep.subr.mxu0 0.0
  %659 = vmatpush2.msra.mxu0 0.0
  %660 = vmatprep.subr.mxu0 0.0
  %661 = vmatpush2.msra.mxu0 0.0
  %662 = vmatprep.subr.mxu0 0.0
  %663 = vmatpush2.msra.mxu0 0.0
  %664 = vmatprep.subr.mxu0 0.0
  %665 = vmatpush2.msra.mxu0 0.0
  %666 = vmatprep.subr.mxu0 0.0
  %667 = vmatpush2.msra.mxu0 0.0
  %668 = vmatprep.subr.mxu0 0.0
  %669 = vmatpush2.msra.mxu0 0.0
  %670 = vmatprep.subr.mxu0 0.0
  %671 = vmatpush2.msra.mxu0 0.0
  %672 = vmatprep.subr.mxu0 0.0
  %673 = vmatpush2.msra.mxu0 0.0
  %674 = vmatprep.subr.mxu0 0.0
  %675 = vmatpush2.msra.mxu0 0.0
  %676 = vmatprep.subr.mxu0 0.0
  %677 = vmatpush2.msra.mxu0 0.0
  %678 = vmatprep.mubr.f32.mxu0 0.0
  %679 = vmatmul.mubr.f32.gmra.mxu0 %v519
  %v680 = vpop.f32.mrf.mxu0
  %v681 = vadd.f32 %v21, %v680
  %v682 = vpop.f32.mrf.mxu0
  %683 = vmatprep.mubr.f32.mxu0 0.0
  %684 = vmatmul.mubr.f32.gmra.mxu0 %v522
  %v685 = vpop.f32.mrf.mxu0
  %v686 = vadd.f32 %v21, %v685
  %v687 = vpop.f32.mrf.mxu0
  %688 = vmatprep.mubr.f32.mxu0 0.0
  %689 = vmatmul.mubr.f32.gmra.mxu0 %v525
  %v690 = vpop.f32.mrf.mxu0
  %v691 = vadd.f32 %v21, %v690
  %v692 = vpop.f32.mrf.mxu0
  %693 = vmatprep.mubr.f32.mxu0 0.0
  %694 = vmatmul.mubr.f32.gmra.mxu0 %v528
  %v695 = vpop.f32.mrf.mxu0
  %v696 = vadd.f32 %v21, %v695
  %v697 = vpop.f32.mrf.mxu0
  %698 = vmatprep.mubr.f32.mxu0 0.0
  %699 = vmatmul.mubr.f32.gmra.mxu0 %v531
  %v700 = vpop.f32.mrf.mxu0
  %v701 = vadd.f32 %v21, %v700
  %v702 = vpop.f32.mrf.mxu0
  %703 = vmatprep.mubr.f32.mxu0 0.0
  %704 = vmatmul.mubr.f32.gmra.mxu0 %v534
  %v705 = vpop.f32.mrf.mxu0
  %v706 = vadd.f32 %v21, %v705
  %v707 = vpop.f32.mrf.mxu0
  %708 = vmatprep.mubr.f32.mxu0 0.0
  %709 = vmatmul.mubr.f32.gmra.mxu0 %v537
  %v710 = vpop.f32.mrf.mxu0
  %v711 = vadd.f32 %v21, %v710
  %v712 = vpop.f32.mrf.mxu0
  %713 = vmatprep.mubr.f32.mxu0 0.0
  %714 = vmatmul.mubr.f32.gmra.mxu0 %v540
  %v715 = vpop.f32.mrf.mxu0
  %v716 = vadd.f32 %v21, %v715
  %v717 = vpop.f32.mrf.mxu0
  %718 = vmatprep.mubr.f32.mxu0 0.0
  %719 = vmatmul.mubr.f32.gmra.mxu0 %v543
  %v720 = vpop.f32.mrf.mxu0
  %v721 = vadd.f32 %v21, %v720
  %v722 = vpop.f32.mrf.mxu0
  %723 = vmatprep.mubr.f32.mxu0 0.0
  %724 = vmatmul.mubr.f32.gmra.mxu0 %v546
  %v725 = vpop.f32.mrf.mxu0
  %v726 = vadd.f32 %v21, %v725
  %v727 = vpop.f32.mrf.mxu0
  %728 = vmatprep.mubr.f32.mxu0 0.0
  %729 = vmatmul.mubr.f32.gmra.mxu0 %v549
  %v730 = vpop.f32.mrf.mxu0
  %v731 = vadd.f32 %v21, %v730
  %v732 = vpop.f32.mrf.mxu0
  %733 = vmatprep.mubr.f32.mxu0 0.0
  %734 = vmatmul.mubr.f32.gmra.mxu0 %v552
  %v735 = vpop.f32.mrf.mxu0
  %v736 = vadd.f32 %v21, %v735
  %v737 = vpop.f32.mrf.mxu0
  %738 = vmatprep.mubr.f32.mxu0 0.0
  %739 = vmatmul.mubr.f32.gmra.mxu0 %v555
  %v740 = vpop.f32.mrf.mxu0
  %v741 = vadd.f32 %v21, %v740
  %v742 = vpop.f32.mrf.mxu0
  %743 = vmatprep.mubr.f32.mxu0 0.0
  %744 = vmatmul.mubr.f32.gmra.mxu0 %v558
  %v745 = vpop.f32.mrf.mxu0
  %v746 = vadd.f32 %v21, %v745
  %v747 = vpop.f32.mrf.mxu0
  %748 = vmatprep.mubr.f32.mxu0 0.0
  %749 = vmatmul.mubr.f32.gmra.mxu0 %v561
  %v750 = vpop.f32.mrf.mxu0
  %v751 = vadd.f32 %v21, %v750
  %v752 = vpop.f32.mrf.mxu0
  %753 = vmatprep.mubr.f32.mxu0 0.0
  %754 = vmatmul.mubr.f32.gmra.mxu0 %v564
  %v755 = vpop.f32.mrf.mxu0
  %v756 = vadd.f32 %v21, %v755
  %v757 = vpop.f32.mrf.mxu0
  %758 = vmatprep.mubr.f32.mxu0 0.0
  %759 = vmatmul.mubr.f32.gmra.mxu0 %v567
  %v760 = vpop.f32.mrf.mxu0
  %v761 = vadd.f32 %v21, %v760
  %v762 = vpop.f32.mrf.mxu0
  %763 = vmatprep.mubr.f32.mxu0 0.0
  %764 = vmatmul.mubr.f32.gmra.mxu0 %v570
  %v765 = vpop.f32.mrf.mxu0
  %v766 = vadd.f32 %v21, %v765
  %v767 = vpop.f32.mrf.mxu0
  %768 = vmatprep.mubr.f32.mxu0 0.0
  %769 = vmatmul.mubr.f32.gmra.mxu0 %v573
  %v770 = vpop.f32.mrf.mxu0
  %v771 = vadd.f32 %v21, %v770
  %v772 = vpop.f32.mrf.mxu0
  %773 = vmatprep.mubr.f32.mxu0 0.0
  %774 = vmatmul.mubr.f32.gmra.mxu0 %v576
  %v775 = vpop.f32.mrf.mxu0
  %v776 = vadd.f32 %v21, %v775
  %v777 = vpop.f32.mrf.mxu0
  %778 = vmatprep.mubr.f32.mxu0 0.0
  %779 = vmatmul.mubr.f32.gmra.mxu0 %v579
  %v780 = vpop.f32.mrf.mxu0
  %v781 = vadd.f32 %v21, %v780
  %v782 = vpop.f32.mrf.mxu0
  %783 = vmatprep.mubr.f32.mxu0 0.0
  %784 = vmatmul.mubr.f32.gmra.mxu0 %v582
  %v785 = vpop.f32.mrf.mxu0
  %v786 = vadd.f32 %v21, %v785
  %v787 = vpop.f32.mrf.mxu0
  %788 = vmatprep.mubr.f32.mxu0 0.0
  %789 = vmatmul.mubr.f32.gmra.mxu0 %v585
  %v790 = vpop.f32.mrf.mxu0
  %v791 = vadd.f32 %v21, %v790
  %v792 = vpop.f32.mrf.mxu0
  %793 = vmatprep.mubr.f32.mxu0 0.0
  %794 = vmatmul.mubr.f32.gmra.mxu0 %v588
  %v795 = vpop.f32.mrf.mxu0
  %v796 = vadd.f32 %v21, %v795
  %v797 = vpop.f32.mrf.mxu0
  %798 = vmatprep.mubr.f32.mxu0 0.0
  %799 = vmatmul.mubr.f32.gmra.mxu0 %v591
  %v800 = vpop.f32.mrf.mxu0
  %v801 = vadd.f32 %v21, %v800
  %v802 = vpop.f32.mrf.mxu0
  %803 = vmatprep.mubr.f32.mxu0 0.0
  %804 = vmatmul.mubr.f32.gmra.mxu0 %v594
  %v805 = vpop.f32.mrf.mxu0
  %v806 = vadd.f32 %v21, %v805
  %v807 = vpop.f32.mrf.mxu0
  %808 = vmatprep.mubr.f32.mxu0 0.0
  %809 = vmatmul.mubr.f32.gmra.mxu0 %v597
  %v810 = vpop.f32.mrf.mxu0
  %v811 = vadd.f32 %v21, %v810
  %v812 = vpop.f32.mrf.mxu0
  %813 = vmatprep.mubr.f32.mxu0 0.0
  %814 = vmatmul.mubr.f32.gmra.mxu0 %v600
  %v815 = vpop.f32.mrf.mxu0
  %v816 = vadd.f32 %v21, %v815
  %v817 = vpop.f32.mrf.mxu0
  %818 = vmatprep.mubr.f32.mxu0 0.0
  %819 = vmatmul.mubr.f32.gmra.mxu0 %v603
  %v820 = vpop.f32.mrf.mxu0
  %v821 = vadd.f32 %v21, %v820
  %v822 = vpop.f32.mrf.mxu0
  %823 = vmatprep.mubr.f32.mxu0 0.0
  %824 = vmatmul.mubr.f32.gmra.mxu0 %v606
  %v825 = vpop.f32.mrf.mxu0
  %v826 = vadd.f32 %v21, %v825
  %v827 = vpop.f32.mrf.mxu0
  %828 = vmatprep.mubr.f32.mxu0 0.0
  %829 = vmatmul.mubr.f32.gmra.mxu0 %v609
  %v830 = vpop.f32.mrf.mxu0
  %v831 = vadd.f32 %v21, %v830
  %v832 = vpop.f32.mrf.mxu0
  %833 = vmatprep.mubr.f32.mxu0 0.0
  %834 = vmatmul.mubr.f32.gmra.mxu0 %v612
  %v835 = vpop.f32.mrf.mxu0
  %v836 = vadd.f32 %v21, %v835
  %v837 = vpop.f32.mrf.mxu0
  %838 = vdwg.mxu0
  %s839 = scalar_lea.vmem %s3, 256
  %840 = vst.msk [vmem:[%s839] sm:$0xff] %vm416, %v681
  %841 = vst.msk [vmem:[%s839 + $0x8] sm:$0xff] %vm416, %v686
  %842 = vst.msk [vmem:[%s839 + $0x10] sm:$0xff] %vm416, %v691
  %843 = vst.msk [vmem:[%s839 + $0x18] sm:$0xff] %vm416, %v696
  %844 = vst.msk [vmem:[%s839 + $0x20] sm:$0xff] %vm416, %v701
  %845 = vst.msk [vmem:[%s839 + $0x28] sm:$0xff] %vm416, %v706
  %846 = vst.msk [vmem:[%s839 + $0x30] sm:$0xff] %vm416, %v711
  %847 = vst.msk [vmem:[%s839 + $0x38] sm:$0xff] %vm416, %v716
  %848 = vst.msk [vmem:[%s839 + $0x40] sm:$0xff] %vm416, %v721
  %849 = vst.msk [vmem:[%s839 + $0x48] sm:$0xff] %vm416, %v726
  %850 = vst.msk [vmem:[%s839 + $0x50] sm:$0xff] %vm416, %v731
  %851 = vst.msk [vmem:[%s839 + $0x58] sm:$0xff] %vm416, %v736
  %852 = vst.msk [vmem:[%s839 + $0x60] sm:$0xff] %vm416, %v741
  %853 = vst.msk [vmem:[%s839 + $0x68] sm:$0xff] %vm416, %v746
  %854 = vst.msk [vmem:[%s839 + $0x70] sm:$0xff] %vm416, %v751
  %855 = vst.msk [vmem:[%s839 + $0x78] sm:$0xff] %vm416, %v756
  %856 = vst.msk [vmem:[%s839 + $0x80] sm:$0xff] %vm416, %v761
  %857 = vst.msk [vmem:[%s839 + $0x88] sm:$0xff] %vm416, %v766
  %858 = vst.msk [vmem:[%s839 + $0x90] sm:$0xff] %vm416, %v771
  %859 = vst.msk [vmem:[%s839 + $0x98] sm:$0xff] %vm416, %v776
  %860 = vst.msk [vmem:[%s839 + $0xa0] sm:$0xff] %vm416, %v781
  %861 = vst.msk [vmem:[%s839 + $0xa8] sm:$0xff] %vm416, %v786
  %862 = vst.msk [vmem:[%s839 + $0xb0] sm:$0xff] %vm416, %v791
  %863 = vst.msk [vmem:[%s839 + $0xb8] sm:$0xff] %vm416, %v796
  %864 = vst.msk [vmem:[%s839 + $0xc0] sm:$0xff] %vm416, %v801
  %865 = vst.msk [vmem:[%s839 + $0xc8] sm:$0xff] %vm416, %v806
  %866 = vst.msk [vmem:[%s839 + $0xd0] sm:$0xff] %vm416, %v811
  %867 = vst.msk [vmem:[%s839 + $0xd8] sm:$0xff] %vm416, %v816
  %868 = vst.msk [vmem:[%s839 + $0xe0] sm:$0xff] %vm416, %v821
  %869 = vst.msk [vmem:[%s839 + $0xe8] sm:$0xff] %vm416, %v826
  %870 = vst.msk [vmem:[%s839 + $0xf0] sm:$0xff] %vm416, %v831
  %871 = vst.msk [vmem:[%s839 + $0xf8] sm:$0xff] %vm416, %v836
  // Predicated region
  $region14: #{segformer_mlp.1} parent=0 // pred_check
    _
  $region15: #{segformer_mlp.1} parent=0 // pred_check_branch
    %873 = sbr.rel (0) target = $region17
  $region16: #{segformer_mlp.1} parent=0 // pred_region
    _
  $region17: #{segformer_mlp.1} parent=0 // pred_fallthru
    _
  // Predicated region
  $region18: #{segformer_mlp.1} parent=0 // pred_check
    _
  $region19: #{segformer_mlp.1} parent=0 // pred_check_branch
    %875 = sbr.rel (0) target = $region21
  $region20: #{segformer_mlp.1} parent=0 // pred_region
    _
  $region21: #{segformer_mlp.1} parent=0 // pred_fallthru
    _

</llo_original>
